<compile_context>
chip_gen: v6e
topology: v6e:2x2x1
jax: 0.10.0
libtpu: 0.0.40
codegen_flags: <defaults>
</compile_context>

<pallas_src>
import functools

import jax
import jax.numpy as jnp
from jax.experimental import pallas as pl
from jax.experimental.pallas import tpu as pltpu

# ---- module hyper-params (SpecAugment.__init__ defaults) ----
FREQ_MASK = 20
TIME_MASK = 50
FREQ_STRIPES = 2
TIME_STRIPES = 2
P = 1.0

_NB = 2 * FREQ_STRIPES + 2 * TIME_STRIPES   # packed bound columns per (b, c) row


def _specaug_kernel(x_ref, b_ref, o_ref, *, T, freq_stripes, time_stripes):
    """Block = (R, F*T): R full-sublane rows of flattened (F*T) spectrogram."""
    x = x_ref[...]                                    # (R, FT) float
    b = b_ref[...]                                    # (R, _NB) int32 packed bounds
    R, FT = x.shape

    flat = jax.lax.broadcasted_iota(jnp.int32, (R, FT), 1)
    if T & (T - 1) == 0:                              # power of two -> cheap AND
        time_idx = flat & (T - 1)
    else:
        time_idx = flat % T

    def stripe_hit(idx, col):
        start = b[:, col:col + 1]                     # (R, 1)
        width = b[:, col + 1:col + 2] - start         # (R, 1), always >= 0
        # idx in [start, end)  <=>  uint32(idx - start) < uint32(end - start)
        return (idx - start).astype(jnp.uint32) < width.astype(jnp.uint32)

    masked = None
    for s in range(freq_stripes):                     # freq stripe = contiguous flat range
        m = stripe_hit(flat, 2 * s)
        masked = m if masked is None else masked | m
    off = 2 * freq_stripes
    for s in range(time_stripes):                     # time stripe = range test on flat % T
        m = stripe_hit(time_idx, off + 2 * s)
        masked = m if masked is None else masked | m

    if masked is None:
        o_ref[...] = x
    else:
        o_ref[...] = jnp.where(masked, jnp.zeros((), x.dtype), x)


def _draw_stripe_bounds(key, B, C, n_stripes, mask_param, axis_len):
    """torchaudio mask_along_axis_iid semantics: independent draw per (b, c, stripe)."""
    k_val, k_min = jax.random.split(key)
    value = jax.random.uniform(k_val, (B, C, n_stripes)) * mask_param
    min_value = jax.random.uniform(k_min, (B, C, n_stripes)) * (axis_len - value)
    start = min_value.astype(jnp.int32)               # floor (values are >= 0)
    end = (min_value + value).astype(jnp.int32)       # floor
    return start, end                                 # (B, C, n_stripes) int32


def _choose_row_block(rows, bytes_per_row):
    """Largest multiple-of-8 divisor of `rows` near ~2 MiB blocks, keeping >=2 steps."""
    if rows % 8 != 0:
        return rows                                   # full-extent block (always legal)
    target = max(8, ((2 << 20) // max(bytes_per_row, 1)) // 8 * 8)
    r = max(8, min(rows, target) // 8 * 8)
    while rows % r != 0:                              # make it an exact divisor of rows
        r -= 8
    # Keep >= 2 grid steps so "parallel" shards across both v7x TensorCores.
    if rows // r < 2 and rows >= 16:
        half = (rows // 2) // 8 * 8
        if half >= 8 and rows % half == 0:
            r = half
    return r


@functools.partial(jax.jit, static_argnames=("p",))
def spec_augment(audio, key, p=P):
    """audio: (B, C, F, T) float32 spectrograms (torch/torchaudio layout)."""
    B, C, F, T = audio.shape
    rows, FT = B * C, F * T

    k_gate, k_f, k_t = jax.random.split(key, 3)

    # `if self.p > torch.randn(1)` gate (one standard-normal draw per forward call).
    gate = p > jax.random.normal(k_gate, ())

    f_start, f_end = _draw_stripe_bounds(k_f, B, C, FREQ_STRIPES, FREQ_MASK, F)
    t_start, t_end = _draw_stripe_bounds(k_t, B, C, TIME_STRIPES, TIME_MASK, T)

    # Pack all stripe bounds into ONE (rows, 8) int32 array:
    #   [fs0*T, fe0*T, fs1*T, fe1*T, ts0, te0, ts1, te1]
    # Frequency bounds are pre-scaled by T so a frequency stripe over F becomes the
    # contiguous flat-index range [fs*T, fe*T) after the row-major (F,T)->(F*T) reshape.
    freq_cols = jnp.stack([f_start * T, f_end * T], axis=-1).reshape(rows, 2 * FREQ_STRIPES)
    time_cols = jnp.stack([t_start, t_end], axis=-1).reshape(rows, 2 * TIME_STRIPES)
    bounds = jnp.concatenate([freq_cols, time_cols], axis=-1).astype(jnp.int32)

    x2 = audio.reshape(rows, FT)                      # lane-dense flat layout

    R = _choose_row_block(rows, FT * audio.dtype.itemsize)
    grid = (rows // R,)

    block_bytes = R * FT * audio.dtype.itemsize
    # 2x (in + out) double-buffered blocks + packed bounds + slack; clamp for v7x VMEM.
    vmem_limit = min(max(4 * block_bytes + (2 << 20), 8 << 20), 32 << 20)

    kernel = functools.partial(_specaug_kernel, T=T,
                               freq_stripes=FREQ_STRIPES, time_stripes=TIME_STRIPES)

    masked_call = pl.pallas_call(
        kernel,
        out_shape=jax.ShapeDtypeStruct((rows, FT), audio.dtype),
        grid=grid,
        in_specs=[
            pl.BlockSpec((R, FT), lambda i: (i, 0)),
            pl.BlockSpec((R, _NB), lambda i: (i, 0)),
        ],
        out_specs=pl.BlockSpec((R, FT), lambda i: (i, 0)),
        input_output_aliases={0: 0},                  # reuse the input slab for the output
        compiler_params=pltpu.CompilerParams(
            dimension_semantics=("parallel",),
            vmem_limit_bytes=vmem_limit),
        cost_estimate=pl.CostEstimate(
            flops=8 * rows * FT,
            transcendentals=0,
            bytes_accessed=2 * rows * FT * audio.dtype.itemsize),
    )

    def _apply(x2_):
        return masked_call(x2_, bounds)

    # Gate short-circuit: skip the kernel (and its HBM traffic) when not applied.
    out2 = jax.lax.cond(gate, _apply, lambda x_: x_, x2)
    out = out2.reshape(B, C, F, T)
    return out, (gate, f_start, f_end, t_start, t_end)


def _reference(audio, gate, f_start, f_end, t_start, t_end):
    B, C, F, T = audio.shape
    fidx = jnp.arange(F)[None, None, :, None]
    tidx = jnp.arange(T)[None, None, None, :]
    keep = jnp.ones((B, C, F, T), dtype=bool)
    for s in range(FREQ_STRIPES):
        keep &= ~((fidx >= f_start[:, :, s, None, None]) & (fidx < f_end[:, :, s, None, None]))
    for s in range(TIME_STRIPES):
        keep &= ~((tidx >= t_start[:, :, s, None, None]) & (tidx < t_end[:, :, s, None, None]))
    masked = jnp.where(keep, audio, 0.0)
    return jnp.where(gate, masked, audio)


if __name__ == "__main__":
    key = jax.random.PRNGKey(0)
    k_data, k_aug = jax.random.split(key)

    # freq bins (32) > freq_mask (20), time frames (64) > time_mask (50)
    B, C, F, T = 2, 4, 32, 64
    audio = jax.random.normal(k_data, (B, C, F, T), dtype=jnp.float32)

    out, rands = spec_augment(audio, k_aug)
    out = jax.block_until_ready(out)

    ref = _reference(audio, *rands)
    assert out.shape == audio.shape and out.dtype == audio.dtype
    assert jnp.allclose(out, ref), "mismatch vs pure-JAX reference"

    print("KERNEL_OK")
</pallas_src>

<mosaic_0001>
module attributes {stable_mosaic.version = 11 : i64} {
  func.func @_specaug_kernel(%arg0: i32, %arg1: memref<8x2048xf32, #tpu.memory_space<vmem>>, %arg2: memref<8x8xi32, #tpu.memory_space<vmem>>, %arg3: memref<8x2048xf32, #tpu.memory_space<vmem>>) attributes {dimension_semantics = [#tpu.dimension_semantics<parallel>], iteration_bounds = array<i64: 1>, scalar_prefetch = 0 : i64, scratch_operands = 0 : i64, tpu.core_type = #tpu.core_type<tc>, window_params = [{transform_indices = @transform_0, window_bounds = array<i64: 8, 2048>}, {transform_indices = @transform_1, window_bounds = array<i64: 8, 8>}, {transform_indices = @transform_2, window_bounds = array<i64: 8, 2048>}]} {
    %c0 = arith.constant 0 : index
    %c0_0 = arith.constant 0 : index
    %0 = vector.load %arg1[%c0, %c0_0] : memref<8x2048xf32, #tpu.memory_space<vmem>>, vector<8x2048xf32>
    %c0_1 = arith.constant 0 : index
    %c0_2 = arith.constant 0 : index
    %1 = vector.load %arg2[%c0_1, %c0_2] : memref<8x8xi32, #tpu.memory_space<vmem>>, vector<8x8xi32>
    %2 = tpu.iota {dimensions = array<i32: 1>} : vector<8x2048xi32>
    %c63_i32 = arith.constant 63 : i32
    %3 = vector.broadcast %c63_i32 : i32 to vector<8x2048xi32>
    %4 = arith.andi %2, %3 : vector<8x2048xi32>
    %5 = vector.extract_strided_slice %1 {offsets = [0, 0], sizes = [8, 1], strides = [1, 1]} : vector<8x8xi32> to vector<8x1xi32>
    %6 = vector.extract_strided_slice %1 {offsets = [0, 1], sizes = [8, 1], strides = [1, 1]} : vector<8x8xi32> to vector<8x1xi32>
    %7 = arith.subi %6, %5 : vector<8x1xi32>
    %8 = vector.broadcast %5 : vector<8x1xi32> to vector<8x2048xi32>
    %9 = arith.subi %2, %8 : vector<8x2048xi32>
    %10 = vector.broadcast %7 : vector<8x1xi32> to vector<8x2048xi32>
    %11 = arith.cmpi ult, %9, %10 : vector<8x2048xi32>
    %12 = vector.extract_strided_slice %1 {offsets = [0, 2], sizes = [8, 1], strides = [1, 1]} : vector<8x8xi32> to vector<8x1xi32>
    %13 = vector.extract_strided_slice %1 {offsets = [0, 3], sizes = [8, 1], strides = [1, 1]} : vector<8x8xi32> to vector<8x1xi32>
    %14 = arith.subi %13, %12 : vector<8x1xi32>
    %15 = vector.broadcast %12 : vector<8x1xi32> to vector<8x2048xi32>
    %16 = arith.subi %2, %15 : vector<8x2048xi32>
    %17 = vector.broadcast %14 : vector<8x1xi32> to vector<8x2048xi32>
    %18 = arith.cmpi ult, %16, %17 : vector<8x2048xi32>
    %19 = arith.ori %11, %18 : vector<8x2048xi1>
    %20 = vector.extract_strided_slice %1 {offsets = [0, 4], sizes = [8, 1], strides = [1, 1]} : vector<8x8xi32> to vector<8x1xi32>
    %21 = vector.extract_strided_slice %1 {offsets = [0, 5], sizes = [8, 1], strides = [1, 1]} : vector<8x8xi32> to vector<8x1xi32>
    %22 = arith.subi %21, %20 : vector<8x1xi32>
    %23 = vector.broadcast %20 : vector<8x1xi32> to vector<8x2048xi32>
    %24 = arith.subi %4, %23 : vector<8x2048xi32>
    %25 = vector.broadcast %22 : vector<8x1xi32> to vector<8x2048xi32>
    %26 = arith.cmpi ult, %24, %25 : vector<8x2048xi32>
    %27 = arith.ori %19, %26 : vector<8x2048xi1>
    %28 = vector.extract_strided_slice %1 {offsets = [0, 6], sizes = [8, 1], strides = [1, 1]} : vector<8x8xi32> to vector<8x1xi32>
    %29 = vector.extract_strided_slice %1 {offsets = [0, 7], sizes = [8, 1], strides = [1, 1]} : vector<8x8xi32> to vector<8x1xi32>
    %30 = arith.subi %29, %28 : vector<8x1xi32>
    %31 = vector.broadcast %28 : vector<8x1xi32> to vector<8x2048xi32>
    %32 = arith.subi %4, %31 : vector<8x2048xi32>
    %33 = vector.broadcast %30 : vector<8x1xi32> to vector<8x2048xi32>
    %34 = arith.cmpi ult, %32, %33 : vector<8x2048xi32>
    %35 = arith.ori %27, %34 : vector<8x2048xi1>
    %cst = arith.constant 0.000000e+00 : f32
    %36 = vector.broadcast %cst : f32 to vector<8x2048xf32>
    %37 = arith.select %35, %36, %0 : vector<8x2048xi1>, vector<8x2048xf32>
    %c0_3 = arith.constant 0 : index
    %c0_4 = arith.constant 0 : index
    %38 = vector.load %arg3[%c0_3, %c0_4] : memref<8x2048xf32, #tpu.memory_space<vmem>>, vector<8x2048xf32>
    tpu.vector_store %arg3[%c0_3, %c0_4], %37 {strides = array<i32>} : memref<8x2048xf32, #tpu.memory_space<vmem>>, vector<8x2048xf32>,
    return
  }
  func.func @transform_0(%arg0: i32) -> (i32, i32) {
    %c0_i32 = arith.constant 0 : i32
    %c0_i32_0 = arith.constant 0 : i32
    return %arg0, %c0_i32 : i32, i32
  }
  func.func @transform_1(%arg0: i32) -> (i32, i32) {
    %c0_i32 = arith.constant 0 : i32
    %c0_i32_0 = arith.constant 0 : i32
    return %arg0, %c0_i32 : i32, i32
  }
  func.func @transform_2(%arg0: i32) -> (i32, i32) {
    %c0_i32 = arith.constant 0 : i32
    %c0_i32_0 = arith.constant 0 : i32
    return %arg0, %c0_i32 : i32, i32
  }
}

</mosaic_0001>

<llo_original>
// kernel: branch_1_fun.1
$region0: #{branch_1_fun.1}
  #allocation0 [shape = 'u32[]', space=smem, size = 0x4, offset = 0x4, fixed_abs, tag = 'smem constant byte address 0x4 - core index']
  #allocation1 [shape = 'u32[144,128]{1,0:T(1,128)}', space=vmem, size = 0x12000, scoped, tag = 'internal scratch']
  %s0 = inlined_call_operand.vmem [shape: f32[8,2048], index: 0, kind: input, shape index: {}, may-alias: {0,2}]
  %s1 = inlined_call_operand.vmem [shape: s32[8,8], index: 1, kind: input, shape index: {}]
  %s2 = inlined_call_operand.vmem [shape: f32[8,2048], index: 2, kind: output, shape index: {}, may-alias: {0,2}]
  %s3 = sld [smem:[#allocation0]]
  $region18: #{branch_1_fun.1} parent=0
    _
  %s5 = ssub.s32 1, %s3
  %s6 = scalar_select 0, %s5, %s3
  // Predicated region
  $region2: #{branch_1_fun.1} parent=0 // pred_check
    _
  $region3: #{branch_1_fun.1} parent=0 // pred_check_branch
    %8 = sbr.rel (0) target = $region5
  $region4: #{branch_1_fun.1} parent=0 // pred_region
    _
  $region5: #{branch_1_fun.1} parent=0 // pred_fallthru
    _
  // Predicated region
  $region6: #{branch_1_fun.1} parent=0 // pred_check
    _
  $region7: #{branch_1_fun.1} parent=0 // pred_check_branch
    %10 = sbr.rel (0) target = $region9
  $region8: #{branch_1_fun.1} parent=0 // pred_region
    _
  $region9: #{branch_1_fun.1} parent=0 // pred_fallthru
    _
  %v11 = vld [vmem:[%s0] sm:$0xff]
  %v12 = vld [vmem:[%s0 + $0x8] sm:$0xff]
  %v13 = vld [vmem:[%s0 + $0x10] sm:$0xff]
  %v14 = vld [vmem:[%s0 + $0x18] sm:$0xff]
  %v15 = vld [vmem:[%s0 + $0x20] sm:$0xff]
  %v16 = vld [vmem:[%s0 + $0x28] sm:$0xff]
  %v17 = vld [vmem:[%s0 + $0x30] sm:$0xff]
  %v18 = vld [vmem:[%s0 + $0x38] sm:$0xff]
  %v19 = vld [vmem:[%s0 + $0x40] sm:$0xff]
  %v20 = vld [vmem:[%s0 + $0x48] sm:$0xff]
  %v21 = vld [vmem:[%s0 + $0x50] sm:$0xff]
  %v22 = vld [vmem:[%s0 + $0x58] sm:$0xff]
  %v23 = vld [vmem:[%s0 + $0x60] sm:$0xff]
  %v24 = vld [vmem:[%s0 + $0x68] sm:$0xff]
  %v25 = vld [vmem:[%s0 + $0x70] sm:$0xff]
  %v26 = vld [vmem:[%s0 + $0x78] sm:$0xff]
  %v27 = vld [vmem:[%s1] sm:$0xff]
  %v28 = vlaneseq
  %v29 = vand.u32 %v28, 127
  %v30 = vadd.s32 %v29, 128
  %v31 = vadd.s32 %v29, 256
  %v32 = vadd.s32 %v29, 384
  %v33 = vadd.s32 %v29, 512
  %v34 = vadd.s32 %v29, 640
  %v35 = vadd.s32 %v29, 768
  %v36 = vadd.s32 %v29, 896
  %v37 = vadd.s32 %v29, 1024
  %v38 = vadd.s32 %v29, 1152
  %v39 = vadd.s32 %v29, 1280
  %v40 = vadd.s32 %v29, 1408
  %v41 = vadd.s32 %v29, 1536
  %v42 = vadd.s32 %v29, 1664
  %v43 = vadd.s32 %v29, 1792
  %v44 = vadd.s32 %v29, 1920
  %v45 = vand.u32 %v29, 63
  %v46 = vand.u32 %v30, 63
  %v47 = vand.u32 %v31, 63
  %v48 = vand.u32 %v32, 63
  %v49 = vand.u32 %v33, 63
  %v50 = vand.u32 %v34, 63
  %v51 = vand.u32 %v35, 63
  %v52 = vand.u32 %v36, 63
  %v53 = vand.u32 %v37, 63
  %v54 = vand.u32 %v38, 63
  %v55 = vand.u32 %v39, 63
  %v56 = vand.u32 %v40, 63
  %v57 = vand.u32 %v41, 63
  %v58 = vand.u32 %v42, 63
  %v59 = vand.u32 %v43, 63
  %v60 = vand.u32 %v44, 63
  %61 = vrot.lane.b32.xlu0 %v27, 1
  %v62 = vpop.permute.xlu0 %61
  %v63 = vsub.s32 %v27, %v62
  %64 = vset.pattern.permute.xlu0 0
  %65 = vperm.xlu0 %64, %v27
  %v66 = vpop.permute.xlu0 %65
  %v67 = vsub.s32 %v29, %v66
  %v68 = vsub.s32 %v30, %v66
  %v69 = vsub.s32 %v31, %v66
  %v70 = vsub.s32 %v32, %v66
  %v71 = vsub.s32 %v33, %v66
  %v72 = vsub.s32 %v34, %v66
  %v73 = vsub.s32 %v35, %v66
  %v74 = vsub.s32 %v36, %v66
  %v75 = vsub.s32 %v37, %v66
  %v76 = vsub.s32 %v38, %v66
  %v77 = vsub.s32 %v39, %v66
  %v78 = vsub.s32 %v40, %v66
  %v79 = vsub.s32 %v41, %v66
  %v80 = vsub.s32 %v42, %v66
  %v81 = vsub.s32 %v43, %v66
  %v82 = vsub.s32 %v44, %v66
  %83 = vset.pattern.permute.xlu0 1
  %84 = vperm.xlu0 %83, %v63
  %v85 = vpop.permute.xlu0 %84
  %vm86 = vcmp.lt.u32.totalorder %v67, %v85
  %vm87 = vcmp.lt.u32.totalorder %v68, %v85
  %vm88 = vcmp.lt.u32.totalorder %v69, %v85
  %vm89 = vcmp.lt.u32.totalorder %v70, %v85
  %vm90 = vcmp.lt.u32.totalorder %v71, %v85
  %vm91 = vcmp.lt.u32.totalorder %v72, %v85
  %vm92 = vcmp.lt.u32.totalorder %v73, %v85
  %vm93 = vcmp.lt.u32.totalorder %v74, %v85
  %vm94 = vcmp.lt.u32.totalorder %v75, %v85
  %vm95 = vcmp.lt.u32.totalorder %v76, %v85
  %vm96 = vcmp.lt.u32.totalorder %v77, %v85
  %vm97 = vcmp.lt.u32.totalorder %v78, %v85
  %vm98 = vcmp.lt.u32.totalorder %v79, %v85
  %vm99 = vcmp.lt.u32.totalorder %v80, %v85
  %vm100 = vcmp.lt.u32.totalorder %v81, %v85
  %vm101 = vcmp.lt.u32.totalorder %v82, %v85
  %102 = vset.pattern.permute.xlu0 2
  %103 = vperm.xlu0 %102, %v27
  %v104 = vpop.permute.xlu0 %103
  %v105 = vsub.s32 %v29, %v104
  %v106 = vsub.s32 %v30, %v104
  %v107 = vsub.s32 %v31, %v104
  %v108 = vsub.s32 %v32, %v104
  %v109 = vsub.s32 %v33, %v104
  %v110 = vsub.s32 %v34, %v104
  %v111 = vsub.s32 %v35, %v104
  %v112 = vsub.s32 %v36, %v104
  %v113 = vsub.s32 %v37, %v104
  %v114 = vsub.s32 %v38, %v104
  %v115 = vsub.s32 %v39, %v104
  %v116 = vsub.s32 %v40, %v104
  %v117 = vsub.s32 %v41, %v104
  %v118 = vsub.s32 %v42, %v104
  %v119 = vsub.s32 %v43, %v104
  %v120 = vsub.s32 %v44, %v104
  %121 = vset.pattern.permute.xlu0 3
  %122 = vperm.xlu0 %121, %v63
  %v123 = vpop.permute.xlu0 %122
  %vm124 = vcmp.lt.u32.totalorder %v105, %v123
  %vm125 = vcmp.lt.u32.totalorder %v106, %v123
  %vm126 = vcmp.lt.u32.totalorder %v107, %v123
  %vm127 = vcmp.lt.u32.totalorder %v108, %v123
  %vm128 = vcmp.lt.u32.totalorder %v109, %v123
  %vm129 = vcmp.lt.u32.totalorder %v110, %v123
  %vm130 = vcmp.lt.u32.totalorder %v111, %v123
  %vm131 = vcmp.lt.u32.totalorder %v112, %v123
  %vm132 = vcmp.lt.u32.totalorder %v113, %v123
  %vm133 = vcmp.lt.u32.totalorder %v114, %v123
  %vm134 = vcmp.lt.u32.totalorder %v115, %v123
  %vm135 = vcmp.lt.u32.totalorder %v116, %v123
  %vm136 = vcmp.lt.u32.totalorder %v117, %v123
  %vm137 = vcmp.lt.u32.totalorder %v118, %v123
  %vm138 = vcmp.lt.u32.totalorder %v119, %v123
  %vm139 = vcmp.lt.u32.totalorder %v120, %v123
  %vm140 = vmor %vm86, %vm124
  %vm141 = vmor %vm87, %vm125
  %vm142 = vmor %vm88, %vm126
  %vm143 = vmor %vm89, %vm127
  %vm144 = vmor %vm90, %vm128
  %vm145 = vmor %vm91, %vm129
  %vm146 = vmor %vm92, %vm130
  %vm147 = vmor %vm93, %vm131
  %vm148 = vmor %vm94, %vm132
  %vm149 = vmor %vm95, %vm133
  %vm150 = vmor %vm96, %vm134
  %vm151 = vmor %vm97, %vm135
  %vm152 = vmor %vm98, %vm136
  %vm153 = vmor %vm99, %vm137
  %vm154 = vmor %vm100, %vm138
  %vm155 = vmor %vm101, %vm139
  %156 = vset.pattern.permute.xlu0 4
  %157 = vperm.xlu0 %156, %v27
  %v158 = vpop.permute.xlu0 %157
  %v159 = vsub.s32 %v45, %v158
  %v160 = vsub.s32 %v46, %v158
  %v161 = vsub.s32 %v47, %v158
  %v162 = vsub.s32 %v48, %v158
  %v163 = vsub.s32 %v49, %v158
  %v164 = vsub.s32 %v50, %v158
  %v165 = vsub.s32 %v51, %v158
  %v166 = vsub.s32 %v52, %v158
  %v167 = vsub.s32 %v53, %v158
  %v168 = vsub.s32 %v54, %v158
  %v169 = vsub.s32 %v55, %v158
  %v170 = vsub.s32 %v56, %v158
  %v171 = vsub.s32 %v57, %v158
  %v172 = vsub.s32 %v58, %v158
  %v173 = vsub.s32 %v59, %v158
  %v174 = vsub.s32 %v60, %v158
  %175 = vset.pattern.permute.xlu0 5
  %176 = vperm.xlu0 %175, %v63
  %v177 = vpop.permute.xlu0 %176
  %vm178 = vcmp.lt.u32.totalorder %v159, %v177
  %vm179 = vcmp.lt.u32.totalorder %v160, %v177
  %vm180 = vcmp.lt.u32.totalorder %v161, %v177
  %vm181 = vcmp.lt.u32.totalorder %v162, %v177
  %vm182 = vcmp.lt.u32.totalorder %v163, %v177
  %vm183 = vcmp.lt.u32.totalorder %v164, %v177
  %vm184 = vcmp.lt.u32.totalorder %v165, %v177
  %vm185 = vcmp.lt.u32.totalorder %v166, %v177
  %vm186 = vcmp.lt.u32.totalorder %v167, %v177
  %vm187 = vcmp.lt.u32.totalorder %v168, %v177
  %vm188 = vcmp.lt.u32.totalorder %v169, %v177
  %vm189 = vcmp.lt.u32.totalorder %v170, %v177
  %vm190 = vcmp.lt.u32.totalorder %v171, %v177
  %vm191 = vcmp.lt.u32.totalorder %v172, %v177
  %vm192 = vcmp.lt.u32.totalorder %v173, %v177
  %vm193 = vcmp.lt.u32.totalorder %v174, %v177
  %vm194 = vmor %vm140, %vm178
  %vm195 = vmor %vm141, %vm179
  %vm196 = vmor %vm142, %vm180
  %vm197 = vmor %vm143, %vm181
  %vm198 = vmor %vm144, %vm182
  %vm199 = vmor %vm145, %vm183
  %vm200 = vmor %vm146, %vm184
  %vm201 = vmor %vm147, %vm185
  %vm202 = vmor %vm148, %vm186
  %vm203 = vmor %vm149, %vm187
  %vm204 = vmor %vm150, %vm188
  %vm205 = vmor %vm151, %vm189
  %vm206 = vmor %vm152, %vm190
  %vm207 = vmor %vm153, %vm191
  %vm208 = vmor %vm154, %vm192
  %vm209 = vmor %vm155, %vm193
  %210 = vset.pattern.permute.xlu0 6
  %211 = vperm.xlu0 %210, %v27
  %v212 = vpop.permute.xlu0 %211
  %v213 = vsub.s32 %v45, %v212
  %v214 = vsub.s32 %v46, %v212
  %v215 = vsub.s32 %v47, %v212
  %v216 = vsub.s32 %v48, %v212
  %v217 = vsub.s32 %v49, %v212
  %v218 = vsub.s32 %v50, %v212
  %v219 = vsub.s32 %v51, %v212
  %v220 = vsub.s32 %v52, %v212
  %v221 = vsub.s32 %v53, %v212
  %v222 = vsub.s32 %v54, %v212
  %v223 = vsub.s32 %v55, %v212
  %v224 = vsub.s32 %v56, %v212
  %v225 = vsub.s32 %v57, %v212
  %v226 = vsub.s32 %v58, %v212
  %v227 = vsub.s32 %v59, %v212
  %v228 = vsub.s32 %v60, %v212
  %229 = vset.pattern.permute.xlu0 7
  %230 = vperm.xlu0 %229, %v63
  %v231 = vpop.permute.xlu0 %230
  %vm232 = vcmp.lt.u32.totalorder %v213, %v231
  %vm233 = vcmp.lt.u32.totalorder %v214, %v231
  %vm234 = vcmp.lt.u32.totalorder %v215, %v231
  %vm235 = vcmp.lt.u32.totalorder %v216, %v231
  %vm236 = vcmp.lt.u32.totalorder %v217, %v231
  %vm237 = vcmp.lt.u32.totalorder %v218, %v231
  %vm238 = vcmp.lt.u32.totalorder %v219, %v231
  %vm239 = vcmp.lt.u32.totalorder %v220, %v231
  %vm240 = vcmp.lt.u32.totalorder %v221, %v231
  %vm241 = vcmp.lt.u32.totalorder %v222, %v231
  %vm242 = vcmp.lt.u32.totalorder %v223, %v231
  %vm243 = vcmp.lt.u32.totalorder %v224, %v231
  %vm244 = vcmp.lt.u32.totalorder %v225, %v231
  %vm245 = vcmp.lt.u32.totalorder %v226, %v231
  %vm246 = vcmp.lt.u32.totalorder %v227, %v231
  %vm247 = vcmp.lt.u32.totalorder %v228, %v231
  %vm248 = vmor %vm194, %vm232
  %vm249 = vmor %vm195, %vm233
  %vm250 = vmor %vm196, %vm234
  %vm251 = vmor %vm197, %vm235
  %vm252 = vmor %vm198, %vm236
  %vm253 = vmor %vm199, %vm237
  %vm254 = vmor %vm200, %vm238
  %vm255 = vmor %vm201, %vm239
  %vm256 = vmor %vm202, %vm240
  %vm257 = vmor %vm203, %vm241
  %vm258 = vmor %vm204, %vm242
  %vm259 = vmor %vm205, %vm243
  %vm260 = vmor %vm206, %vm244
  %vm261 = vmor %vm207, %vm245
  %vm262 = vmor %vm208, %vm246
  %vm263 = vmor %vm209, %vm247
  %v264 = vsel %vm248, 0.0, %v11
  %v265 = vsel %vm249, 0.0, %v12
  %v266 = vsel %vm250, 0.0, %v13
  %v267 = vsel %vm251, 0.0, %v14
  %v268 = vsel %vm252, 0.0, %v15
  %v269 = vsel %vm253, 0.0, %v16
  %v270 = vsel %vm254, 0.0, %v17
  %v271 = vsel %vm255, 0.0, %v18
  %v272 = vsel %vm256, 0.0, %v19
  %v273 = vsel %vm257, 0.0, %v20
  %v274 = vsel %vm258, 0.0, %v21
  %v275 = vsel %vm259, 0.0, %v22
  %v276 = vsel %vm260, 0.0, %v23
  %v277 = vsel %vm261, 0.0, %v24
  %v278 = vsel %vm262, 0.0, %v25
  %v279 = vsel %vm263, 0.0, %v26
  %280 = vst [vmem:[%s2] sm:$0xff] %v264
  %281 = vst [vmem:[%s2 + $0x8] sm:$0xff] %v265
  %282 = vst [vmem:[%s2 + $0x10] sm:$0xff] %v266
  %283 = vst [vmem:[%s2 + $0x18] sm:$0xff] %v267
  %284 = vst [vmem:[%s2 + $0x20] sm:$0xff] %v268
  %285 = vst [vmem:[%s2 + $0x28] sm:$0xff] %v269
  %286 = vst [vmem:[%s2 + $0x30] sm:$0xff] %v270
  %287 = vst [vmem:[%s2 + $0x38] sm:$0xff] %v271
  %288 = vst [vmem:[%s2 + $0x40] sm:$0xff] %v272
  %289 = vst [vmem:[%s2 + $0x48] sm:$0xff] %v273
  %290 = vst [vmem:[%s2 + $0x50] sm:$0xff] %v274
  %291 = vst [vmem:[%s2 + $0x58] sm:$0xff] %v275
  %292 = vst [vmem:[%s2 + $0x60] sm:$0xff] %v276
  %293 = vst [vmem:[%s2 + $0x68] sm:$0xff] %v277
  %294 = vst [vmem:[%s2 + $0x70] sm:$0xff] %v278
  %295 = vst [vmem:[%s2 + $0x78] sm:$0xff] %v279
  // Predicated region
  $region10: #{branch_1_fun.1} parent=0 // pred_check
    _
  $region11: #{branch_1_fun.1} parent=0 // pred_check_branch
    %297 = sbr.rel (0) target = $region13
  $region12: #{branch_1_fun.1} parent=0 // pred_region
    _
  $region13: #{branch_1_fun.1} parent=0 // pred_fallthru
    _
  // Predicated region
  $region14: #{branch_1_fun.1} parent=0 // pred_check
    _
  $region15: #{branch_1_fun.1} parent=0 // pred_check_branch
    %299 = sbr.rel (0) target = $region17
  $region16: #{branch_1_fun.1} parent=0 // pred_region
    _
  $region17: #{branch_1_fun.1} parent=0 // pred_fallthru
    _

</llo_original>
